<compile_context>
chip_gen: v7x
topology: tpu7x:2x2x1
jax: 0.10.0
libtpu: 0.0.40
codegen_flags: <defaults>
</compile_context>

<pallas_src>
import jax
import jax.numpy as jnp
import numpy as np
from jax.experimental import pallas as pl
from jax.experimental.pallas import tpu as pltpu

# Hyper-parameters from TransCF.__init__
MARGIN = 1.0
DIS_REG = 0.1
NEI_REG = 0.1


def _round_up(x, m):
    return (x + m - 1) // m * m


def _vmem_capacity_bytes():
    """Physical VMEM of the current generation (conservative fallback)."""
    try:
        info = pltpu.get_tpu_info()
        cap = getattr(info, "vmem_capacity_bytes", None)
        if cap:
            return int(cap)
    except Exception:
        pass
    return 64 * 2 ** 20  # v7x is the smallest


def _make_kernel(margin, dis_reg, nei_reg, dim, d_off, tb):
    """Kernel closure over static hyper-params / valid feature extent / tiles."""
    margin = float(margin)
    dis_reg = float(dis_reg)
    nei_reg = float(nei_reg)

    def kernel(u_ref, ip_ref, in_ref, bag_ref, rhs_ref, out_ref, acc_ref):
        # Grid position -- read ONLY at top level (interpret / Mosaic safe;
        # never inside pl.when bodies).
        k = pl.program_id(1)
        k_last = pl.num_programs(1) - 1

        @pl.when(k == 0)
        def _init():
            acc_ref[...] = jnp.zeros_like(acc_ref)

        # Single MXU pass per grid step: stacked [ubag; pbag; nbag] tile against
        # the lane-fused [item_tbl | user_tbl] slab; f32 accumulation regardless
        # of the streaming dtype.
        acc_ref[...] += jnp.dot(bag_ref[...], rhs_ref[...],
                                preferred_element_type=jnp.float32)

        @pl.when(k == k_last)
        def _finalize():
            w = acc_ref.shape[1]          # fused RHS lane width
            d_out = u_ref.shape[1]        # padded embedding width (d_pad)
            acc = acc_ref[...]

            # Constant selection matrices: item product -> lanes [0:D], user
            # product (lane offset d_off in the fused slab) -> lanes [0:D].
            # Garbage cross-product lanes and lane padding map to exact zeros,
            # so no explicit masks are required downstream.
            r = jax.lax.broadcasted_iota(jnp.int32, (w, d_out), 0)
            c = jax.lax.broadcasted_iota(jnp.int32, (w, d_out), 1)
            sel_item = jnp.where((r == c) & (c < dim), 1.0, 0.0)
            sel_user = jnp.where((r == c + d_off) & (c < dim), 1.0, 0.0)

            pun = jnp.dot(acc[:tb], sel_item,
                          preferred_element_type=jnp.float32)   # mean item emb of user's items
            pn = jnp.dot(acc[tb:], sel_user,
                         preferred_element_type=jnp.float32)
            pin = pn[:tb]                 # mean user emb of users of pos item
            nin = pn[tb:]                 # mean user emb of users of neg item

            u = u_ref[...].astype(jnp.float32)
            ip = ip_ref[...].astype(jnp.float32)
            inn = in_ref[...].astype(jnp.float32)

            base_p = u + pun * pin - ip
            base_n = u + pun * nin - inn
            pos_d = base_p * base_p       # elementwise (B, D) -- no sum, as in torch
            neg_d = base_n * base_n

            hinge = jnp.maximum(margin + pos_d - neg_d, 0.0)
            du = u - pun
            di = ip - pin
            # Fused hinge + both regularizers; padded rows/lanes contribute
            # exactly `margin` here (corrected by a constant in the wrapper).
            out_ref[...] = hinge + dis_reg * pos_d + nei_reg * (du * du + di * di)

    return kernel


def transcf_loss(u_emb, ip_emb, in_emb, user_bag, pos_bag, neg_bag,
                 item_tbl, user_tbl, *, margin=MARGIN, dis_reg=DIS_REG,
                 nei_reg=NEI_REG, tb=None, tk=None,
                 stream_dtype=jnp.bfloat16):
    """TransCF batch loss.

    By default everything is streamed as bf16 (the kernel is HBM-bandwidth
    bound); accumulation and the loss math stay f32.  Pass stream_dtype=None
    to stream in the input dtype (e.g. exact f32 checks).
    """
    B, D = u_emb.shape
    Ni = item_tbl.shape[0]
    Nu = user_tbl.shape[0]
    assert user_bag.shape == (B, Ni)
    assert pos_bag.shape == (B, Nu) and neg_bag.shape == (B, Nu)

    if stream_dtype is not None:
        cast = lambda x: x.astype(stream_dtype)
        u_emb, ip_emb, in_emb = cast(u_emb), cast(ip_emb), cast(in_emb)
        user_bag, pos_bag, neg_bag = cast(user_bag), cast(pos_bag), cast(neg_bag)
        item_tbl, user_tbl = cast(item_tbl), cast(user_tbl)
    dt = u_emb.dtype
    itemsize = jnp.dtype(dt).itemsize

    # Batch tile (sublanes, multiple of 16 so bf16 blocks are native tiles) and
    # table-row contraction tile (lanes of the bags, 256-granular for the
    # v6e/v7x MXU K dim; still a multiple of 128 for v5e).
    if tb is None:
        tb = min(256, _round_up(B, 16))
    if tk is None:
        tk = min(1024, _round_up(max(Ni, Nu), 256))
    tb = _round_up(tb, 16)
    tk = _round_up(tk, 128)

    d_pad = _round_up(D, 128)                 # lane axis of embeddings / output
    b_pad = _round_up(B, tb)
    n_pad = _round_up(max(Ni, Nu), tk)        # shared contraction extent
    nb, nk = b_pad // tb, n_pad // tk

    # Lane-fused RHS slab: item_tbl in lanes [0:D], user_tbl in lanes
    # [d_off:d_off+D].  When 2*D <= 128 both tables share one 128-lane slab
    # (half the table DMA bytes, one MXU pass / RHS push per step).
    d_off = D if 2 * D <= 128 else d_pad
    w = _round_up(d_off + D, 128)
    rhs = jnp.zeros((n_pad, w), dt)
    rhs = rhs.at[:Ni, :D].set(item_tbl)
    rhs = rhs.at[:Nu, d_off:d_off + D].set(user_tbl)

    def pad2(x, rows, cols):
        return jnp.pad(x, ((0, rows - x.shape[0]), (0, cols - x.shape[1])))

    u_p = pad2(u_emb, b_pad, d_pad)
    ip_p = pad2(ip_emb, b_pad, d_pad)
    in_p = pad2(in_emb, b_pad, d_pad)

    # Pre-stack [ubag; pbag; nbag] per batch tile -> the kernel reads a single
    # (3*tb, tk) LHS block per step (no in-kernel concatenate).
    ubag_p = pad2(user_bag, b_pad, n_pad).reshape(nb, tb, n_pad)
    pbag_p = pad2(pos_bag, b_pad, n_pad).reshape(nb, tb, n_pad)
    nbag_p = pad2(neg_bag, b_pad, n_pad).reshape(nb, tb, n_pad)
    bag = jnp.concatenate([ubag_p, pbag_p, nbag_p], axis=1).reshape(3 * b_pad, n_pad)

    emb_spec = pl.BlockSpec((tb, d_pad), lambda b, k: (b, 0))
    bag_spec = pl.BlockSpec((3 * tb, tk), lambda b, k: (b, k))
    rhs_spec = pl.BlockSpec((tk, w), lambda b, k: (k, 0))
    out_spec = pl.BlockSpec((tb, d_pad), lambda b, k: (b, 0))

    # Double-buffered per-step streaming working set + f32 accumulator + out.
    vmem_est = 2 * (3 * tb * d_pad + 3 * tb * tk + tk * w) * itemsize
    vmem_est += (3 * tb * w + 2 * tb * d_pad) * 4
    cap = _vmem_capacity_bytes()
    vmem_limit = int(min(max(vmem_est + (4 << 20), 32 << 20), int(0.75 * cap)))

    partials = pl.pallas_call(
        _make_kernel(margin, dis_reg, nei_reg, D, d_off, tb),
        out_shape=jax.ShapeDtypeStruct((b_pad, d_pad), jnp.float32),
        grid_spec=pltpu.PrefetchScalarGridSpec(
            num_scalar_prefetch=0,
            grid=(nb, nk),
            in_specs=[emb_spec, emb_spec, emb_spec, bag_spec, rhs_spec],
            out_specs=out_spec,
            scratch_shapes=[pltpu.VMEM((3 * tb, w), jnp.float32)]),
        compiler_params=pltpu.CompilerParams(
            dimension_semantics=("parallel", "arbitrary"),
            vmem_limit_bytes=vmem_limit),
    )(u_p, ip_p, in_p, bag, rhs)

    # Every zero-padded (row, lane) position contributes exactly `margin`
    # through the hinge and 0 through every other term -> constant correction.
    pad_hinge = max(float(margin), 0.0) * float(b_pad * d_pad - B * D)
    return jnp.sum(partials) - pad_hinge


def _reference(u, ip, inn, ubag, pbag, nbag, item_tbl, user_tbl):
    f = lambda x: x.astype(jnp.float32)
    u, ip, inn = f(u), f(ip), f(inn)
    pun = f(ubag) @ f(item_tbl)
    pin = f(pbag) @ f(user_tbl)
    nin = f(nbag) @ f(user_tbl)
    pos_d = (u + pun * pin - ip) ** 2
    neg_d = (u + pun * nin - inn) ** 2
    loss = jnp.maximum(MARGIN + pos_d - neg_d, 0.0).sum()
    loss = loss + DIS_REG * pos_d.sum()
    loss = loss + NEI_REG * (((u - pun) ** 2).sum() + ((ip - pin) ** 2).sum())
    return loss


if __name__ == "__main__":
    key = jax.random.PRNGKey(0)
    NUM_USERS, NUM_ITEMS, DIM, B = 200, 300, 48, 40

    k1, k2, k3, k4, k5, k6 = jax.random.split(key, 6)

    # init_weights(): normal(mean=0, std=0.01)
    user_tbl = (0.01 * jax.random.normal(k1, (NUM_USERS, DIM))).astype(jnp.float32)
    item_tbl = (0.01 * jax.random.normal(k2, (NUM_ITEMS, DIM))).astype(jnp.float32)

    # Synthetic interaction matrix standing in for userCache / itemCache.
    R = jax.random.bernoulli(k3, 0.05, (NUM_USERS, NUM_ITEMS))
    R = R.at[jnp.arange(NUM_USERS), jnp.arange(NUM_USERS) % NUM_ITEMS].set(True)
    R = R.at[jnp.arange(NUM_ITEMS) % NUM_USERS, jnp.arange(NUM_ITEMS)].set(True)
    Rf = R.astype(jnp.float32)

    user_ids = jax.random.randint(k4, (B,), 0, NUM_USERS)
    pos_ids = jax.random.randint(k5, (B,), 0, NUM_ITEMS)
    neg_ids = jax.random.randint(k6, (B,), 0, NUM_ITEMS)

    # Glue: EmbeddingBag with offsets=range(B) on single ids == plain lookup.
    u_emb = user_tbl[user_ids]
    ip_emb = item_tbl[pos_ids]
    in_emb = item_tbl[neg_ids]

    # Glue: getNeighbors() -> dense mean-bag weight matrices (1/count).
    user_rows = Rf[user_ids]                                   # (B, NUM_ITEMS)
    user_bag = user_rows / jnp.maximum(user_rows.sum(-1, keepdims=True), 1.0)
    pos_cols = Rf[:, pos_ids].T                                # (B, NUM_USERS)
    pos_bag = pos_cols / jnp.maximum(pos_cols.sum(-1, keepdims=True), 1.0)
    neg_cols = Rf[:, neg_ids].T                                # (B, NUM_USERS)
    neg_bag = neg_cols / jnp.maximum(neg_cols.sum(-1, keepdims=True), 1.0)

    args = (u_emb, ip_emb, in_emb, user_bag, pos_bag, neg_bag, item_tbl, user_tbl)

    # --- f32 streaming check, grid (3 batch tiles x 3 contraction tiles) ---
    out_f32 = jax.block_until_ready(
        transcf_loss(*args, tb=16, tk=128, stream_dtype=None))
    ref_f32 = _reference(*args)
    np.testing.assert_allclose(float(out_f32), float(ref_f32),
                               rtol=1e-4, atol=1e-2)

    # --- default bf16 streaming path (f32 accumulate), same small tiles ---
    out_bf16 = jax.block_until_ready(transcf_loss(*args, tb=16, tk=128))
    ref_bf16 = _reference(*tuple(x.astype(jnp.bfloat16) for x in args))
    np.testing.assert_allclose(float(out_bf16), float(ref_bf16),
                               rtol=1e-2, atol=5e-1)

    # --- default (large) tiles, bf16 streaming ---
    out_def = jax.block_until_ready(transcf_loss(*args))
    np.testing.assert_allclose(float(out_def), float(ref_bf16),
                               rtol=1e-2, atol=5e-1)

    print("KERNEL_OK")
</pallas_src>

<mosaic_0001>
module attributes {stable_mosaic.version = 11 : i64} {
  func.func @kernel(%arg0: i32, %arg1: i32, %arg2: memref<16x128xf32, #tpu.memory_space<vmem>>, %arg3: memref<16x128xf32, #tpu.memory_space<vmem>>, %arg4: memref<16x128xf32, #tpu.memory_space<vmem>>, %arg5: memref<48x128xf32, #tpu.memory_space<vmem>>, %arg6: memref<128x128xf32, #tpu.memory_space<vmem>>, %arg7: memref<16x128xf32, #tpu.memory_space<vmem>>, %arg8: memref<48x128xf32, #tpu.memory_space<vmem>>) attributes {dimension_semantics = [#tpu.dimension_semantics<parallel>, #tpu.dimension_semantics<arbitrary>], iteration_bounds = array<i64: 3, 3>, scalar_prefetch = 0 : i64, scratch_operands = 1 : i64, tpu.core_type = #tpu.core_type<tc>, window_params = [{transform_indices = @transform_0, window_bounds = array<i64: 16, 128>}, {transform_indices = @transform_1, window_bounds = array<i64: 16, 128>}, {transform_indices = @transform_2, window_bounds = array<i64: 16, 128>}, {transform_indices = @transform_3, window_bounds = array<i64: 48, 128>}, {transform_indices = @transform_4, window_bounds = array<i64: 128, 128>}, {transform_indices = @transform_5, window_bounds = array<i64: 16, 128>}]} {
    %c0_i32 = arith.constant 0 : i32
    %0 = arith.cmpi eq, %arg1, %c0_i32 : i32
    %1 = arith.extui %0 : i1 to i32
    %c0_i32_0 = arith.constant 0 : i32
    %2 = arith.cmpi ne, %1, %c0_i32_0 : i32
    scf.if %2 {
      %cst_9 = arith.constant 0.000000e+00 : f32
      %12 = vector.broadcast %cst_9 : f32 to vector<48x128xf32>
      %c0_10 = arith.constant 0 : index
      %c0_11 = arith.constant 0 : index
      %13 = vector.load %arg8[%c0_10, %c0_11] : memref<48x128xf32, #tpu.memory_space<vmem>>, vector<48x128xf32>
      tpu.vector_store %arg8[%c0_10, %c0_11], %12 {strides = array<i32>} : memref<48x128xf32, #tpu.memory_space<vmem>>, vector<48x128xf32>,
    } else {
    }
    %c0 = arith.constant 0 : index
    %c0_1 = arith.constant 0 : index
    %3 = vector.load %arg8[%c0, %c0_1] : memref<48x128xf32, #tpu.memory_space<vmem>>, vector<48x128xf32>
    %c0_2 = arith.constant 0 : index
    %c0_3 = arith.constant 0 : index
    %4 = vector.load %arg5[%c0_2, %c0_3] : memref<48x128xf32, #tpu.memory_space<vmem>>, vector<48x128xf32>
    %c0_4 = arith.constant 0 : index
    %c0_5 = arith.constant 0 : index
    %5 = vector.load %arg6[%c0_4, %c0_5] : memref<128x128xf32, #tpu.memory_space<vmem>>, vector<128x128xf32>
    %cst = arith.constant dense<0.000000e+00> : vector<48x128xf32>
    %6 = tpu.matmul %4, %5, %cst {dimension_numbers = #tpu.dot_dimension_numbers<[1], [0], [0], [1], [0, 0, 1, 1], [], []>} : vector<48x128xf32>, vector<128x128xf32>, vector<48x128xf32> -> vector<48x128xf32>
    %7 = arith.addf %3, %6 : vector<48x128xf32>
    %c0_6 = arith.constant 0 : index
    %c0_7 = arith.constant 0 : index
    %8 = vector.load %arg8[%c0_6, %c0_7] : memref<48x128xf32, #tpu.memory_space<vmem>>, vector<48x128xf32>
    tpu.vector_store %arg8[%c0_6, %c0_7], %7 {strides = array<i32>} : memref<48x128xf32, #tpu.memory_space<vmem>>, vector<48x128xf32>,
    %c2_i32 = arith.constant 2 : i32
    %9 = arith.cmpi eq, %arg1, %c2_i32 : i32
    %10 = arith.extui %9 : i1 to i32
    %c0_i32_8 = arith.constant 0 : i32
    %11 = arith.cmpi ne, %10, %c0_i32_8 : i32
    scf.if %11 {
      %c0_9 = arith.constant 0 : index
      %c0_10 = arith.constant 0 : index
      %12 = vector.load %arg8[%c0_9, %c0_10] : memref<48x128xf32, #tpu.memory_space<vmem>>, vector<48x128xf32>
      %13 = tpu.iota {dimensions = array<i32: 0>} : vector<128x128xi32>
      %14 = tpu.iota {dimensions = array<i32: 1>} : vector<128x128xi32>
      %15 = arith.cmpi eq, %13, %14 : vector<128x128xi32>
      %c48_i32 = arith.constant 48 : i32
      %16 = vector.broadcast %c48_i32 : i32 to vector<128x128xi32>
      %17 = arith.cmpi slt, %14, %16 : vector<128x128xi32>
      %18 = arith.andi %15, %17 : vector<128x128xi1>
      %cst_11 = arith.constant 1.000000e+00 : f32
      %cst_12 = arith.constant 0.000000e+00 : f32
      %19 = vector.broadcast %cst_11 : f32 to vector<128x128xf32>
      %20 = vector.broadcast %cst_12 : f32 to vector<128x128xf32>
      %21 = arith.select %18, %19, %20 : vector<128x128xi1>, vector<128x128xf32>
      %c48_i32_13 = arith.constant 48 : i32
      %22 = vector.broadcast %c48_i32_13 : i32 to vector<128x128xi32>
      %23 = arith.addi %14, %22 : vector<128x128xi32>
      %24 = arith.cmpi eq, %13, %23 : vector<128x128xi32>
      %c48_i32_14 = arith.constant 48 : i32
      %25 = vector.broadcast %c48_i32_14 : i32 to vector<128x128xi32>
      %26 = arith.cmpi slt, %14, %25 : vector<128x128xi32>
      %27 = arith.andi %24, %26 : vector<128x128xi1>
      %cst_15 = arith.constant 1.000000e+00 : f32
      %cst_16 = arith.constant 0.000000e+00 : f32
      %28 = vector.broadcast %cst_15 : f32 to vector<128x128xf32>
      %29 = vector.broadcast %cst_16 : f32 to vector<128x128xf32>
      %30 = arith.select %27, %28, %29 : vector<128x128xi1>, vector<128x128xf32>
      %31 = vector.extract_strided_slice %12 {offsets = [0, 0], sizes = [16, 128], strides = [1, 1]} : vector<48x128xf32> to vector<16x128xf32>
      %cst_17 = arith.constant dense<0.000000e+00> : vector<16x128xf32>
      %32 = tpu.matmul %31, %21, %cst_17 {dimension_numbers = #tpu.dot_dimension_numbers<[1], [0], [0], [1], [0, 0, 1, 1], [], []>} : vector<16x128xf32>, vector<128x128xf32>, vector<16x128xf32> -> vector<16x128xf32>
      %33 = vector.extract_strided_slice %12 {offsets = [16, 0], sizes = [32, 128], strides = [1, 1]} : vector<48x128xf32> to vector<32x128xf32>
      %cst_18 = arith.constant dense<0.000000e+00> : vector<32x128xf32>
      %34 = tpu.matmul %33, %30, %cst_18 {dimension_numbers = #tpu.dot_dimension_numbers<[1], [0], [0], [1], [0, 0, 1, 1], [], []>} : vector<32x128xf32>, vector<128x128xf32>, vector<32x128xf32> -> vector<32x128xf32>
      %35 = vector.extract_strided_slice %34 {offsets = [0, 0], sizes = [16, 128], strides = [1, 1]} : vector<32x128xf32> to vector<16x128xf32>
      %36 = vector.extract_strided_slice %34 {offsets = [16, 0], sizes = [16, 128], strides = [1, 1]} : vector<32x128xf32> to vector<16x128xf32>
      %c0_19 = arith.constant 0 : index
      %c0_20 = arith.constant 0 : index
      %37 = vector.load %arg2[%c0_19, %c0_20] : memref<16x128xf32, #tpu.memory_space<vmem>>, vector<16x128xf32>
      %c0_21 = arith.constant 0 : index
      %c0_22 = arith.constant 0 : index
      %38 = vector.load %arg3[%c0_21, %c0_22] : memref<16x128xf32, #tpu.memory_space<vmem>>, vector<16x128xf32>
      %c0_23 = arith.constant 0 : index
      %c0_24 = arith.constant 0 : index
      %39 = vector.load %arg4[%c0_23, %c0_24] : memref<16x128xf32, #tpu.memory_space<vmem>>, vector<16x128xf32>
      %40 = arith.mulf %32, %35 : vector<16x128xf32>
      %41 = arith.addf %37, %40 : vector<16x128xf32>
      %42 = arith.subf %41, %38 : vector<16x128xf32>
      %43 = arith.mulf %32, %36 : vector<16x128xf32>
      %44 = arith.addf %37, %43 : vector<16x128xf32>
      %45 = arith.subf %44, %39 : vector<16x128xf32>
      %46 = arith.mulf %42, %42 : vector<16x128xf32>
      %47 = arith.mulf %45, %45 : vector<16x128xf32>
      %cst_25 = arith.constant 1.000000e+00 : f32
      %48 = vector.broadcast %cst_25 : f32 to vector<16x128xf32>
      %49 = arith.addf %48, %46 : vector<16x128xf32>
      %50 = arith.subf %49, %47 : vector<16x128xf32>
      %cst_26 = arith.constant 0.000000e+00 : f32
      %51 = vector.broadcast %cst_26 : f32 to vector<16x128xf32>
      %52 = arith.maximumf %50, %51 : vector<16x128xf32>
      %53 = arith.subf %37, %32 : vector<16x128xf32>
      %54 = arith.subf %38, %35 : vector<16x128xf32>
      %cst_27 = arith.constant 1.000000e-01 : f32
      %55 = vector.broadcast %cst_27 : f32 to vector<16x128xf32>
      %56 = arith.mulf %55, %46 : vector<16x128xf32>
      %57 = arith.addf %52, %56 : vector<16x128xf32>
      %58 = arith.mulf %53, %53 : vector<16x128xf32>
      %59 = arith.mulf %54, %54 : vector<16x128xf32>
      %60 = arith.addf %58, %59 : vector<16x128xf32>
      %cst_28 = arith.constant 1.000000e-01 : f32
      %61 = vector.broadcast %cst_28 : f32 to vector<16x128xf32>
      %62 = arith.mulf %61, %60 : vector<16x128xf32>
      %63 = arith.addf %57, %62 : vector<16x128xf32>
      %c0_29 = arith.constant 0 : index
      %c0_30 = arith.constant 0 : index
      %64 = vector.load %arg7[%c0_29, %c0_30] : memref<16x128xf32, #tpu.memory_space<vmem>>, vector<16x128xf32>
      tpu.vector_store %arg7[%c0_29, %c0_30], %63 {strides = array<i32>} : memref<16x128xf32, #tpu.memory_space<vmem>>, vector<16x128xf32>,
    } else {
    }
    return
  }
  func.func @transform_0(%arg0: i32, %arg1: i32) -> (i32, i32) {
    %c0_i32 = arith.constant 0 : i32
    %c0_i32_0 = arith.constant 0 : i32
    return %arg0, %c0_i32 : i32, i32
  }
  func.func @transform_1(%arg0: i32, %arg1: i32) -> (i32, i32) {
    %c0_i32 = arith.constant 0 : i32
    %c0_i32_0 = arith.constant 0 : i32
    return %arg0, %c0_i32 : i32, i32
  }
  func.func @transform_2(%arg0: i32, %arg1: i32) -> (i32, i32) {
    %c0_i32 = arith.constant 0 : i32
    %c0_i32_0 = arith.constant 0 : i32
    return %arg0, %c0_i32 : i32, i32
  }
  func.func @transform_3(%arg0: i32, %arg1: i32) -> (i32, i32) {
    %c0_i32 = arith.constant 0 : i32
    return %arg0, %arg1 : i32, i32
  }
  func.func @transform_4(%arg0: i32, %arg1: i32) -> (i32, i32) {
    %c0_i32 = arith.constant 0 : i32
    %c0_i32_0 = arith.constant 0 : i32
    return %arg1, %c0_i32 : i32, i32
  }
  func.func @transform_5(%arg0: i32, %arg1: i32) -> (i32, i32) {
    %c0_i32 = arith.constant 0 : i32
    %c0_i32_0 = arith.constant 0 : i32
    return %arg0, %c0_i32 : i32, i32
  }
}

</mosaic_0001>

<llo_original>
// kernel: tpu_custom_call.1
$region0: #{tpu_custom_call.1}
  #allocation0 [shape = 'u32[]', space=smem, size = 0x4, offset = 0x4, fixed_abs, tag = 'smem constant byte address 0x4 - core index']
  #allocation1 [shape = 'u32[144,128]{1,0:T(1,128)}', space=vmem, size = 0x12000, scoped, tag = 'internal scratch']
  #allocation2 [shape = 'f32[48,128]{1,0:T(8,128)}', space=vmem, size = 0x6000, scoped, tag = 'scratch operand']
  %s0 = inlined_call_operand.hbm [shape: f32[48,128], index: 0, kind: input, shape index: {}]
  %s1 = inlined_call_operand.hbm [shape: f32[48,128], index: 1, kind: input, shape index: {}]
  %s2 = inlined_call_operand.hbm [shape: f32[48,128], index: 2, kind: input, shape index: {}]
  %s3 = inlined_call_operand.hbm [shape: f32[144,384], index: 3, kind: input, shape index: {}]
  %s4 = inlined_call_operand.hbm [shape: f32[384,128], index: 4, kind: input, shape index: {}]
  %s5 = inlined_call_operand.hbm [shape: f32[48,128], index: 5, kind: output, shape index: {}]
  %s6 = sld [smem:[#allocation0]]
  $region81: #{tpu_custom_call.1} parent=0
    _
  %s8 = ssub.s32 1, %s6
  %s9 = scalar_select 0, %s8, %s6
  $region1: #{tpu_custom_call.1} parent=0
    #allocation3 [shape = 'u8[16384]{0}', space=vmem, size = 0x4000, scoped, tag = 'input window, operand 0']
    #allocation4 [shape = 's32[2]{0}', space=sflag, size = 0x8, scoped, tag = 'scoped memory for tpu_custom_call.1']
    #allocation5 [shape = 's32[2]{0}', space=sflag, size = 0x8, scoped, tag = 'scoped memory for tpu_custom_call.1']
    #allocation6 [shape = 'u8[16384]{0}', space=vmem, size = 0x4000, scoped, tag = 'input window, operand 1']
    #allocation7 [shape = 's32[2]{0}', space=sflag, size = 0x8, scoped, tag = 'scoped memory for tpu_custom_call.1']
    #allocation8 [shape = 'u8[16384]{0}', space=vmem, size = 0x4000, scoped, tag = 'input window, operand 2']
    #allocation9 [shape = 'u8[49152]{0}', space=vmem, size = 0xc000, scoped, tag = 'input window, operand 3']
    #allocation10 [shape = 's32[2]{0}', space=sflag, size = 0x8, scoped, tag = 'scoped memory for tpu_custom_call.1']
    #allocation11 [shape = 'u8[131072]{0}', space=vmem, size = 0x20000, scoped, tag = 'input window, operand 4']
    #allocation12 [shape = 'u8[16384]{0}', space=vmem, size = 0x4000, scoped, tag = 'output window, operand 0']
    %10 = vsyncpa [#allocation4], 0
    %s11 = scalar_lea.sflag [#allocation4], 1
    %12 = vsyncpa %s11, 0
    %13 = vsyncpa [#allocation7], 0
    %s14 = scalar_lea.sflag [#allocation7], 1
    %15 = vsyncpa %s14, 0
    %16 = vsyncpa [#allocation10], 0
    %s17 = scalar_lea.sflag [#allocation10], 1
    %18 = vsyncpa %s17, 0
    %19 = vsyncpa [#allocation5], 0
    %s20 = scalar_lea.sflag [#allocation5], 1
    %21 = vsyncpa %s20, 0
    loop: start=0, step=1, limit=11
    $region2: #{tpu_custom_call.1} parent=1 // loop_pre_header
      _
    $region3: #{tpu_custom_call.1} parent=1 // loop_header
      %s23 = sphi 0, %s27
      %p24 = scmp.ge.s32.totalorder %s23, 11
      %s30 = sphi 0, %s42
      %s31 = sphi 0, %s38
      %s32 = sphi 0, %s30
      %s33 = sphi 0, %s31
      %s34 = sphi 0, %s32
      %s35 = sphi 0, %s33
      %s45 = sphi 0, %s47
      %s48 = sphi 0, %s45
      %s49 = sphi 0, %s48
      %s65 = sphi 0, %s49
      %s71 = sphi 0, %s73
      %s74 = sphi 0, %s71
      %s75 = sphi 0, %s74
      %s91 = sphi 0, %s75
      %s97 = sphi 0, %s99
      %s100 = sphi 0, %s97
      %s101 = sphi 0, %s100
      %s117 = sphi 0, %s101
      %s125 = sphi 0, %s127
      %s128 = sphi 0, %s125
      %s129 = sphi 0, %s128
      %s145 = sphi 0, %s129
      %s151 = sphi 0, %s153
      %s154 = sphi 0, %s151
      %s155 = sphi 0, %s154
      %s171 = sphi 0, %s155
      %s177 = sphi 0, %s179
      %s180 = sphi 0, %s177
      %s181 = sphi 0, %s180
      %s197 = sphi 0, %s181
    $region4: #{tpu_custom_call.1} parent=1 // loop_header_branch
      %26 = sbr.rel (%p24) target = $region8
    $region5: #{tpu_custom_call.1} parent=1 // loop_body
      %s28 = ssub.s32 %s23, 1
      %s29 = ssub.s32 %s23, 2
      %s36 = sadd.s32 1, %s31
      %p37 = scmp.ge.s32.totalorder %s36, 3
      %s38 = scalar_select %p37, 0, %s36
      %s39 = sadd.s32 1, %s30
      %s40 = scalar_select %p37, %s39, %s30
      %p41 = scmp.ge.s32.totalorder %s40, 3
      %s42 = scalar_select %p41, 0, %s40
      %s43 = ssub.s32 %s30, %s42
      %p44 = scmp.eq.s32.totalorder %s43, 0
      %s46 = sadd.s32 %s45, 1
      %s47 = scalar_select %p44, %s45, %s46
      %p50 = pneg %p44
      %p51 = scmp.eq.s32.totalorder %s23, 8
      %p52 = por %p50, %p51
      %p53 = scmp.ne.s32.totalorder %s45, %s48
      %p54 = scmp.eq.s32.totalorder %s23, 0
      %p55 = por %p53, %p54
      %p56 = scmp.ne.s32.totalorder %s45, %s48
      %p57 = scmp.eq.s32.totalorder %s28, 8
      %p58 = por %p56, %p57
      %p59 = scmp.ne.s32.totalorder %s48, %s49
      %p60 = scmp.eq.s32.totalorder %s28, 0
      %p61 = por %p59, %p60
      %p62 = scmp.ne.s32.totalorder %s48, %s49
      %p63 = scmp.eq.s32.totalorder %s29, 8
      %p64 = por %p62, %p63
      %p66 = scmp.ne.s32.totalorder %s49, %s65
      %p67 = scmp.eq.s32.totalorder %s29, 0
      %p68 = por %p66, %p67
      %s69 = ssub.s32 %s30, %s42
      %p70 = scmp.eq.s32.totalorder %s69, 0
      %s72 = sadd.s32 %s71, 1
      %s73 = scalar_select %p70, %s71, %s72
      %p76 = pneg %p70
      %p77 = scmp.eq.s32.totalorder %s23, 8
      %p78 = por %p76, %p77
      %p79 = scmp.ne.s32.totalorder %s71, %s74
      %p80 = scmp.eq.s32.totalorder %s23, 0
      %p81 = por %p79, %p80
      %p82 = scmp.ne.s32.totalorder %s71, %s74
      %p83 = scmp.eq.s32.totalorder %s28, 8
      %p84 = por %p82, %p83
      %p85 = scmp.ne.s32.totalorder %s74, %s75
      %p86 = scmp.eq.s32.totalorder %s28, 0
      %p87 = por %p85, %p86
      %p88 = scmp.ne.s32.totalorder %s74, %s75
      %p89 = scmp.eq.s32.totalorder %s29, 8
      %p90 = por %p88, %p89
      %p92 = scmp.ne.s32.totalorder %s75, %s91
      %p93 = scmp.eq.s32.totalorder %s29, 0
      %p94 = por %p92, %p93
      %s95 = ssub.s32 %s30, %s42
      %p96 = scmp.eq.s32.totalorder %s95, 0
      %s98 = sadd.s32 %s97, 1
      %s99 = scalar_select %p96, %s97, %s98
      %p102 = pneg %p96
      %p103 = scmp.eq.s32.totalorder %s23, 8
      %p104 = por %p102, %p103
      %p105 = scmp.ne.s32.totalorder %s97, %s100
      %p106 = scmp.eq.s32.totalorder %s23, 0
      %p107 = por %p105, %p106
      %p108 = scmp.ne.s32.totalorder %s97, %s100
      %p109 = scmp.eq.s32.totalorder %s28, 8
      %p110 = por %p108, %p109
      %p111 = scmp.ne.s32.totalorder %s100, %s101
      %p112 = scmp.eq.s32.totalorder %s28, 0
      %p113 = por %p111, %p112
      %p114 = scmp.ne.s32.totalorder %s100, %s101
      %p115 = scmp.eq.s32.totalorder %s29, 8
      %p116 = por %p114, %p115
      %p118 = scmp.ne.s32.totalorder %s101, %s117
      %p119 = scmp.eq.s32.totalorder %s29, 0
      %p120 = por %p118, %p119
      %s121 = ssub.s32 %s30, %s42
      %s122 = ssub.s32 %s31, %s38
      %s123 = sor.u32 %s121, %s122
      %p124 = scmp.eq.s32.totalorder %s123, 0
      %s126 = sadd.s32 %s125, 1
      %s127 = scalar_select %p124, %s125, %s126
      %p130 = pneg %p124
      %p131 = scmp.eq.s32.totalorder %s23, 8
      %p132 = por %p130, %p131
      %p133 = scmp.ne.s32.totalorder %s125, %s128
      %p134 = scmp.eq.s32.totalorder %s23, 0
      %p135 = por %p133, %p134
      %p136 = scmp.ne.s32.totalorder %s125, %s128
      %p137 = scmp.eq.s32.totalorder %s28, 8
      %p138 = por %p136, %p137
      %p139 = scmp.ne.s32.totalorder %s128, %s129
      %p140 = scmp.eq.s32.totalorder %s28, 0
      %p141 = por %p139, %p140
      %p142 = scmp.ne.s32.totalorder %s128, %s129
      %p143 = scmp.eq.s32.totalorder %s29, 8
      %p144 = por %p142, %p143
      %p146 = scmp.ne.s32.totalorder %s129, %s145
      %p147 = scmp.eq.s32.totalorder %s29, 0
      %p148 = por %p146, %p147
      %s149 = ssub.s32 %s31, %s38
      %p150 = scmp.eq.s32.totalorder %s149, 0
      %s152 = sadd.s32 %s151, 1
      %s153 = scalar_select %p150, %s151, %s152
      %p156 = pneg %p150
      %p157 = scmp.eq.s32.totalorder %s23, 8
      %p158 = por %p156, %p157
      %p159 = scmp.ne.s32.totalorder %s151, %s154
      %p160 = scmp.eq.s32.totalorder %s23, 0
      %p161 = por %p159, %p160
      %p162 = scmp.ne.s32.totalorder %s151, %s154
      %p163 = scmp.eq.s32.totalorder %s28, 8
      %p164 = por %p162, %p163
      %p165 = scmp.ne.s32.totalorder %s154, %s155
      %p166 = scmp.eq.s32.totalorder %s28, 0
      %p167 = por %p165, %p166
      %p168 = scmp.ne.s32.totalorder %s154, %s155
      %p169 = scmp.eq.s32.totalorder %s29, 8
      %p170 = por %p168, %p169
      %p172 = scmp.ne.s32.totalorder %s155, %s171
      %p173 = scmp.eq.s32.totalorder %s29, 0
      %p174 = por %p172, %p173
      %s175 = ssub.s32 %s30, %s42
      %p176 = scmp.eq.s32.totalorder %s175, 0
      %s178 = sadd.s32 %s177, 1
      %s179 = scalar_select %p176, %s177, %s178
      %p182 = pneg %p176
      %p183 = scmp.eq.s32.totalorder %s23, 8
      %p184 = por %p182, %p183
      %p185 = scmp.ne.s32.totalorder %s177, %s180
      %p186 = scmp.eq.s32.totalorder %s23, 0
      %p187 = por %p185, %p186
      %p188 = scmp.ne.s32.totalorder %s177, %s180
      %p189 = scmp.eq.s32.totalorder %s28, 8
      %p190 = por %p188, %p189
      %p191 = scmp.ne.s32.totalorder %s180, %s181
      %p192 = scmp.eq.s32.totalorder %s28, 0
      %p193 = por %p191, %p192
      %p194 = scmp.ne.s32.totalorder %s180, %s181
      %p195 = scmp.eq.s32.totalorder %s29, 8
      %p196 = por %p194, %p195
      %p198 = scmp.ne.s32.totalorder %s181, %s197
      %p199 = scmp.eq.s32.totalorder %s29, 0
      %p200 = por %p198, %p199
      %p201 = scmp.le.s32.totalorder 1, %s23
      %p202 = scmp.lt.s32.totalorder %s23, 10
      %p203 = pnand %p201, %p202
      %p204 = pneg %p203
      // Predicated region
      $region9: #{tpu_custom_call.1} parent=5 // pred_check
        _
      $region10: #{tpu_custom_call.1} parent=5 // pred_check_branch
        %206 = sbr.rel (%p203) target = $region12
      $region11: #{tpu_custom_call.1} parent=5 // pred_region
        %s207 = ssub.s32 %s23, 1
      $region12: #{tpu_custom_call.1} parent=5 // pred_fallthru
        _
      %p208 = scmp.lt.s32.totalorder %s23, 9
      // Predicated region
      $region13: #{tpu_custom_call.1} parent=5 // pred_check
        %p209 = pneg %p208
      $region14: #{tpu_custom_call.1} parent=5 // pred_check_branch
        %211 = sbr.rel (%p209) target = $region16
      $region15: #{tpu_custom_call.1} parent=5 // pred_region
        // Predicated region
        $region17: #{tpu_custom_call.1} parent=15 // pred_check
          %p212 = pneg %p55
        $region18: #{tpu_custom_call.1} parent=15 // pred_check_branch
          %214 = sbr.rel (%p212) target = $region20
        $region19: #{tpu_custom_call.1} parent=15 // pred_region
          %s215 = sand.u32 %s45, 1
          %s216 = scalar_lea.sflag [#allocation4], %s215
          %s217 = sand.u32 %s45, 1
          %s218 = smul.addr %s217, 16
          %s219 = scalar_lea.vmem [#allocation3], %s218
          %s220 = smul.u32 2, %s30
          %s222 = ssub.s32 256, 256
          %223 = vsyncadd %s216, %s222
          %s224 = smul.addr %s220, 128
          %s225 = scalar_lea.hbm %s0, %s224
          %s226 = sshll.u32 %s219, 4
          %s227 = int_to_ptr.vmem [resolvable:$true] %s226
          %232 = dma.hbm_to_vmem [thread:$0]  %s225, 256, %s227, %s216, 128, 128, 8
        $region20: #{tpu_custom_call.1} parent=15 // pred_fallthru
          _
        // Predicated region
        $region21: #{tpu_custom_call.1} parent=15 // pred_check
          %p233 = pneg %p81
        $region22: #{tpu_custom_call.1} parent=15 // pred_check_branch
          %235 = sbr.rel (%p233) target = $region24
        $region23: #{tpu_custom_call.1} parent=15 // pred_region
          %s236 = sand.u32 %s23, 1
          %s237 = scalar_lea.sflag [#allocation7], %s236
          %s238 = sand.u32 %s71, 1
          %s239 = smul.addr %s238, 16
          %s240 = scalar_lea.vmem [#allocation6], %s239
          %s241 = smul.u32 2, %s30
          %s243 = ssub.s32 256, 256
          %244 = vsyncadd %s237, %s243
          %s245 = smul.addr %s241, 128
          %s246 = scalar_lea.hbm %s1, %s245
          %s247 = sshll.u32 %s240, 4
          %s248 = int_to_ptr.vmem [resolvable:$true] %s247
          %253 = dma.hbm_to_vmem [thread:$0]  %s246, 256, %s248, %s237, 128, 128, 8
        $region24: #{tpu_custom_call.1} parent=15 // pred_fallthru
          _
        // Predicated region
        $region25: #{tpu_custom_call.1} parent=15 // pred_check
          %p254 = pneg %p107
        $region26: #{tpu_custom_call.1} parent=15 // pred_check_branch
          %256 = sbr.rel (%p254) target = $region28
        $region27: #{tpu_custom_call.1} parent=15 // pred_region
          %s257 = sand.u32 %s23, 1
          %s258 = scalar_lea.sflag [#allocation7], %s257
          %s259 = sand.u32 %s97, 1
          %s260 = smul.addr %s259, 16
          %s261 = scalar_lea.vmem [#allocation8], %s260
          %s262 = smul.u32 2, %s30
          %s264 = ssub.s32 256, 256
          %265 = vsyncadd %s258, %s264
          %s266 = smul.addr %s262, 128
          %s267 = scalar_lea.hbm %s2, %s266
          %s268 = sshll.u32 %s261, 4
          %s269 = int_to_ptr.vmem [resolvable:$true] %s268
          %274 = dma.hbm_to_vmem [thread:$0]  %s267, 256, %s269, %s258, 128, 128, 8
        $region28: #{tpu_custom_call.1} parent=15 // pred_fallthru
          _
        // Predicated region
        $region29: #{tpu_custom_call.1} parent=15 // pred_check
          %p275 = pneg %p135
        $region30: #{tpu_custom_call.1} parent=15 // pred_check_branch
          %277 = sbr.rel (%p275) target = $region32
        $region31: #{tpu_custom_call.1} parent=15 // pred_region
          %s278 = sand.u32 %s23, 1
          %s279 = scalar_lea.sflag [#allocation10], %s278
          %s280 = sand.u32 %s125, 1
          %s281 = smul.addr %s280, 48
          %s282 = scalar_lea.vmem [#allocation9], %s281
          %s283 = smul.u32 6, %s30
          %s285 = ssub.s32 768, 768
          %286 = vsyncadd %s279, %s285
          %s287 = smul.addr %s283, 3
          %s288 = sadd.s32 %s31, %s287
          %s289 = smul.addr %s288, 128
          %s290 = scalar_lea.hbm %s3, %s289
          %s291 = sshll.u32 %s282, 4
          %s292 = int_to_ptr.vmem [resolvable:$true] %s291
          %297 = dma.hbm_to_vmem [thread:$0]  %s290, 768, %s292, %s279, 384, 128, 8
        $region32: #{tpu_custom_call.1} parent=15 // pred_fallthru
          _
        // Predicated region
        $region33: #{tpu_custom_call.1} parent=15 // pred_check
          %p298 = pneg %p161
        $region34: #{tpu_custom_call.1} parent=15 // pred_check_branch
          %300 = sbr.rel (%p298) target = $region36
        $region35: #{tpu_custom_call.1} parent=15 // pred_region
          %s301 = sand.u32 %s23, 1
          %s302 = scalar_lea.sflag [#allocation10], %s301
          %s303 = sand.u32 %s151, 1
          %s304 = smul.addr %s303, 128
          %s305 = scalar_lea.vmem [#allocation11], %s304
          %s306 = smul.u32 16, %s31
          %s308 = ssub.s32 2048, 2048
          %309 = vsyncadd %s302, %s308
          %s310 = smul.addr %s306, 128
          %s311 = scalar_lea.hbm %s4, %s310
          %s312 = sshll.u32 %s305, 4
          %s313 = int_to_ptr.vmem [resolvable:$true] %s312
          %318 = dma.hbm_to_vmem [thread:$0]  %s311, 2048, %s313, %s302, 128, 128, 8
        $region36: #{tpu_custom_call.1} parent=15 // pred_fallthru
          _
      $region16: #{tpu_custom_call.1} parent=5 // pred_fallthru
        _
      %p319 = scmp.le.s32.totalorder 1, %s23
      %p320 = scmp.lt.s32.totalorder %s23, 10
      %p321 = pnand %p319, %p320
      %p322 = pneg %p321
      // Predicated region
      $region37: #{tpu_custom_call.1} parent=5 // pred_check
        _
      $region38: #{tpu_custom_call.1} parent=5 // pred_check_branch
        %324 = sbr.rel (%p321) target = $region40
      $region39: #{tpu_custom_call.1} parent=5 // pred_region
        %s325 = ssub.s32 %s23, 1
        %s326 = sand.u32 %s48, 1
        %s327 = scalar_lea.sflag [#allocation4], %s326
        %s328 = sand.u32 %s48, 1
        %s329 = smul.addr %s328, 16
        %s330 = scalar_lea.vmem [#allocation3], %s329
        // Predicated region
        $region41: #{tpu_custom_call.1} parent=39 // pred_check
          %p331 = pneg %p61
        $region42: #{tpu_custom_call.1} parent=39 // pred_check_branch
          %333 = sbr.rel (%p331) target = $region44
        $region43: #{tpu_custom_call.1} parent=39 // pred_region
          %334 = dma.done %s327, 256
        $region44: #{tpu_custom_call.1} parent=39 // pred_fallthru
          _
        %s335 = sand.u32 %s28, 1
        %s336 = scalar_lea.sflag [#allocation7], %s335
        %s337 = sand.u32 %s74, 1
        %s338 = smul.addr %s337, 16
        %s339 = scalar_lea.vmem [#allocation6], %s338
        // Predicated region
        $region45: #{tpu_custom_call.1} parent=39 // pred_check
          %p340 = pneg %p87
        $region46: #{tpu_custom_call.1} parent=39 // pred_check_branch
          %342 = sbr.rel (%p340) target = $region48
        $region47: #{tpu_custom_call.1} parent=39 // pred_region
          %343 = dma.done %s336, 256
        $region48: #{tpu_custom_call.1} parent=39 // pred_fallthru
          _
        %s344 = sand.u32 %s28, 1
        %s345 = scalar_lea.sflag [#allocation7], %s344
        %s346 = sand.u32 %s100, 1
        %s347 = smul.addr %s346, 16
        %s348 = scalar_lea.vmem [#allocation8], %s347
        // Predicated region
        $region49: #{tpu_custom_call.1} parent=39 // pred_check
          %p349 = pneg %p113
        $region50: #{tpu_custom_call.1} parent=39 // pred_check_branch
          %351 = sbr.rel (%p349) target = $region52
        $region51: #{tpu_custom_call.1} parent=39 // pred_region
          %352 = dma.done %s345, 256
        $region52: #{tpu_custom_call.1} parent=39 // pred_fallthru
          _
        %s353 = sand.u32 %s28, 1
        %s354 = scalar_lea.sflag [#allocation10], %s353
        %s355 = sand.u32 %s128, 1
        %s356 = smul.addr %s355, 48
        %s357 = scalar_lea.vmem [#allocation9], %s356
        // Predicated region
        $region53: #{tpu_custom_call.1} parent=39 // pred_check
          %p358 = pneg %p141
        $region54: #{tpu_custom_call.1} parent=39 // pred_check_branch
          %360 = sbr.rel (%p358) target = $region56
        $region55: #{tpu_custom_call.1} parent=39 // pred_region
          %361 = dma.done %s354, 768
        $region56: #{tpu_custom_call.1} parent=39 // pred_fallthru
          _
        %s362 = sand.u32 %s28, 1
        %s363 = scalar_lea.sflag [#allocation10], %s362
        %s364 = sand.u32 %s154, 1
        %s365 = smul.addr %s364, 128
        %s366 = scalar_lea.vmem [#allocation11], %s365
        // Predicated region
        $region57: #{tpu_custom_call.1} parent=39 // pred_check
          %p367 = pneg %p167
        $region58: #{tpu_custom_call.1} parent=39 // pred_check_branch
          %369 = sbr.rel (%p367) target = $region60
        $region59: #{tpu_custom_call.1} parent=39 // pred_region
          %370 = dma.done %s363, 2048
        $region60: #{tpu_custom_call.1} parent=39 // pred_fallthru
          _
        %s371 = sand.u32 %s48, 1
        %s372 = scalar_lea.sflag [#allocation4], %s371
        %s373 = sand.u32 %s48, 1
        %s374 = smul.addr %s373, 16
        %s375 = scalar_lea.vmem [#allocation3], %s374
        %p376 = pneg %p61
        %p377 = pneg %p58
        %s378 = sand.u32 %s28, 1
        %s379 = scalar_lea.sflag [#allocation7], %s378
        %s380 = sand.u32 %s74, 1
        %s381 = smul.addr %s380, 16
        %s382 = scalar_lea.vmem [#allocation6], %s381
        %p383 = pneg %p87
        %p384 = pneg %p84
        %s385 = sand.u32 %s28, 1
        %s386 = scalar_lea.sflag [#allocation7], %s385
        %s387 = sand.u32 %s100, 1
        %s388 = smul.addr %s387, 16
        %s389 = scalar_lea.vmem [#allocation8], %s388
        %p390 = pneg %p113
        %p391 = pneg %p110
        %s392 = sand.u32 %s28, 1
        %s393 = scalar_lea.sflag [#allocation10], %s392
        %s394 = sand.u32 %s128, 1
        %s395 = smul.addr %s394, 48
        %s396 = scalar_lea.vmem [#allocation9], %s395
        %p397 = pneg %p141
        %p398 = pneg %p138
        %s399 = sand.u32 %s28, 1
        %s400 = scalar_lea.sflag [#allocation10], %s399
        %s401 = sand.u32 %s154, 1
        %s402 = smul.addr %s401, 128
        %s403 = scalar_lea.vmem [#allocation11], %s402
        %p404 = pneg %p167
        %p405 = pneg %p164
        %p406 = pneg %p193
        %p407 = pneg %p190
        %s408 = sand.u32 %s180, 1
        %s409 = scalar_lea.sflag [#allocation5], %s408
        %s410 = sand.u32 %s180, 1
        %s411 = smul.addr %s410, 16
        %s412 = scalar_lea.vmem [#allocation12], %s411
        %s413 = smul.u32 2, %s32
        %s414 = smul.u32 2, %s32
        %s415 = smul.u32 2, %s32
        %s416 = smul.u32 6, %s32
        %s417 = smul.u32 16, %s33
        %s418 = smul.u32 2, %s32
        %p419 = scmp.eq.s32.totalorder %s33, 0
        // Predicated region
        $region61: #{tpu_custom_call.1} parent=39 // pred_check
          %p420 = pneg %p419
        $region62: #{tpu_custom_call.1} parent=39 // pred_check_branch
          %422 = sbr.rel (%p420) target = $region64
        $region63: #{tpu_custom_call.1} parent=39 // pred_region
          %423 = vst [vmem:[#allocation2] sm:$0xff] 0.0
          %424 = vst [vmem:[#allocation2 + $0x8] sm:$0xff] 0.0
          %425 = vst [vmem:[#allocation2 + $0x10] sm:$0xff] 0.0
          %426 = vst [vmem:[#allocation2 + $0x18] sm:$0xff] 0.0
          %427 = vst [vmem:[#allocation2 + $0x20] sm:$0xff] 0.0
          %428 = vst [vmem:[#allocation2 + $0x28] sm:$0xff] 0.0
        $region64: #{tpu_custom_call.1} parent=39 // pred_fallthru
          _
        %v429 = vld [vmem:[#allocation2] sm:$0xff]
        %v430 = vld [vmem:[#allocation2 + $0x8] sm:$0xff]
        %v431 = vld [vmem:[#allocation2 + $0x10] sm:$0xff]
        %v432 = vld [vmem:[#allocation2 + $0x18] sm:$0xff]
        %v433 = vld [vmem:[#allocation2 + $0x20] sm:$0xff]
        %v434 = vld [vmem:[#allocation2 + $0x28] sm:$0xff]
        %v435 = vld [vmem:[%s357] sm:$0xff]
        %v436 = vld [vmem:[%s357 + $0x8] sm:$0xff]
        %v437 = vld [vmem:[%s357 + $0x10] sm:$0xff]
        %v438 = vld [vmem:[%s357 + $0x18] sm:$0xff]
        %v439 = vld [vmem:[%s357 + $0x20] sm:$0xff]
        %v440 = vld [vmem:[%s357 + $0x28] sm:$0xff]
        %v441 = vld [vmem:[%s366] sm:$0xff]
        %v442 = vld [vmem:[%s366 + $0x8] sm:$0xff]
        %v443 = vld [vmem:[%s366 + $0x10] sm:$0xff]
        %v444 = vld [vmem:[%s366 + $0x18] sm:$0xff]
        %v445 = vld [vmem:[%s366 + $0x20] sm:$0xff]
        %v446 = vld [vmem:[%s366 + $0x28] sm:$0xff]
        %v447 = vld [vmem:[%s366 + $0x30] sm:$0xff]
        %v448 = vld [vmem:[%s366 + $0x38] sm:$0xff]
        %v449 = vld [vmem:[%s366 + $0x40] sm:$0xff]
        %v450 = vld [vmem:[%s366 + $0x48] sm:$0xff]
        %v451 = vld [vmem:[%s366 + $0x50] sm:$0xff]
        %v452 = vld [vmem:[%s366 + $0x58] sm:$0xff]
        %v453 = vld [vmem:[%s366 + $0x60] sm:$0xff]
        %v454 = vld [vmem:[%s366 + $0x68] sm:$0xff]
        %v455 = vld [vmem:[%s366 + $0x70] sm:$0xff]
        %v456 = vld [vmem:[%s366 + $0x78] sm:$0xff]
        %457 = vmatprep.subr.mxu0 0.0
        %458 = vmatpush1.msra.mxu0 %v441
        %459 = vmatprep.subr.mxu0 0.0
        %460 = vmatpush1.msra.mxu0 %v442
        %461 = vmatprep.subr.mxu0 0.0
        %462 = vmatpush1.msra.mxu0 %v443
        %463 = vmatprep.subr.mxu0 0.0
        %464 = vmatpush1.msra.mxu0 %v444
        %465 = vmatprep.subr.mxu0 0.0
        %466 = vmatpush1.msra.mxu0 %v445
        %467 = vmatprep.subr.mxu0 0.0
        %468 = vmatpush1.msra.mxu0 %v446
        %469 = vmatprep.subr.mxu0 0.0
        %470 = vmatpush1.msra.mxu0 %v447
        %471 = vmatprep.subr.mxu0 0.0
        %472 = vmatpush1.msra.mxu0 %v448
        %473 = vmatprep.subr.mxu0 0.0
        %474 = vmatpush1.msra.mxu0 %v449
        %475 = vmatprep.subr.mxu0 0.0
        %476 = vmatpush1.msra.mxu0 %v450
        %477 = vmatprep.subr.mxu0 0.0
        %478 = vmatpush1.msra.mxu0 %v451
        %479 = vmatprep.subr.mxu0 0.0
        %480 = vmatpush1.msra.mxu0 %v452
        %481 = vmatprep.subr.mxu0 0.0
        %482 = vmatpush1.msra.mxu0 %v453
        %483 = vmatprep.subr.mxu0 0.0
        %484 = vmatpush1.msra.mxu0 %v454
        %485 = vmatprep.subr.mxu0 0.0
        %486 = vmatpush1.msra.mxu0 %v455
        %487 = vmatprep.subr.mxu0 0.0
        %488 = vmatpush1.msra.mxu0 %v456
        %489 = vmatprep.subr.mxu0 0.0
        %490 = vmatpush1.msra.mxu0 0.0
        %491 = vmatprep.subr.mxu0 0.0
        %492 = vmatpush1.msra.mxu0 0.0
        %493 = vmatprep.subr.mxu0 0.0
        %494 = vmatpush1.msra.mxu0 0.0
        %495 = vmatprep.subr.mxu0 0.0
        %496 = vmatpush1.msra.mxu0 0.0
        %497 = vmatprep.subr.mxu0 0.0
        %498 = vmatpush1.msra.mxu0 0.0
        %499 = vmatprep.subr.mxu0 0.0
        %500 = vmatpush1.msra.mxu0 0.0
        %501 = vmatprep.subr.mxu0 0.0
        %502 = vmatpush1.msra.mxu0 0.0
        %503 = vmatprep.subr.mxu0 0.0
        %504 = vmatpush1.msra.mxu0 0.0
        %505 = vmatprep.subr.mxu0 0.0
        %506 = vmatpush1.msra.mxu0 0.0
        %507 = vmatprep.subr.mxu0 0.0
        %508 = vmatpush1.msra.mxu0 0.0
        %509 = vmatprep.subr.mxu0 0.0
        %510 = vmatpush1.msra.mxu0 0.0
        %511 = vmatprep.subr.mxu0 0.0
        %512 = vmatpush1.msra.mxu0 0.0
        %513 = vmatprep.subr.mxu0 0.0
        %514 = vmatpush1.msra.mxu0 0.0
        %515 = vmatprep.subr.mxu0 0.0
        %516 = vmatpush1.msra.mxu0 0.0
        %517 = vmatprep.subr.mxu0 0.0
        %518 = vmatpush1.msra.mxu0 0.0
        %519 = vmatprep.subr.mxu0 0.0
        %520 = vmatpush1.msra.mxu0 0.0
        %521 = vmatprep.mubr.f32.mxu0 0.0
        %522 = vmatmul.mubr.f32.gmra.mrb[0].mxu0 %v435
        %v523 = vpop.f32.mrb[0].mxu0
        %v524 = vadd.f32 0.0, %v523
        %v525 = vpop.f32.mrb[0].mxu0
        %526 = vmatprep.mubr.f32.mxu0 0.0
        %527 = vmatmul.mubr.f32.gmra.mrb[0].mxu0 %v436
        %v528 = vpop.f32.mrb[0].mxu0
        %v529 = vadd.f32 0.0, %v528
        %v530 = vpop.f32.mrb[0].mxu0
        %531 = vmatprep.mubr.f32.mxu0 0.0
        %532 = vmatmul.mubr.f32.gmra.mrb[0].mxu0 %v437
        %v533 = vpop.f32.mrb[0].mxu0
        %v534 = vadd.f32 0.0, %v533
        %v535 = vpop.f32.mrb[0].mxu0
        %536 = vmatprep.mubr.f32.mxu0 0.0
        %537 = vmatmul.mubr.f32.gmra.mrb[0].mxu0 %v438
        %v538 = vpop.f32.mrb[0].mxu0
        %v539 = vadd.f32 0.0, %v538
        %v540 = vpop.f32.mrb[0].mxu0
        %541 = vmatprep.mubr.f32.mxu0 0.0
        %542 = vmatmul.mubr.f32.gmra.mrb[0].mxu0 %v439
        %v543 = vpop.f32.mrb[0].mxu0
        %v544 = vadd.f32 0.0, %v543
        %v545 = vpop.f32.mrb[0].mxu0
        %546 = vmatprep.mubr.f32.mxu0 0.0
        %547 = vmatmul.mubr.f32.gmra.mrb[0].mxu0 %v440
        %v548 = vpop.f32.mrb[0].mxu0
        %v549 = vadd.f32 0.0, %v548
        %v550 = vpop.f32.mrb[0].mxu0
        %551 = vdwg.mxu0
        %v552 = vadd.f32 %v429, %v524
        %v553 = vadd.f32 %v430, %v529
        %v554 = vadd.f32 %v431, %v534
        %v555 = vadd.f32 %v432, %v539
        %v556 = vadd.f32 %v433, %v544
        %v557 = vadd.f32 %v434, %v549
        %558 = vst [vmem:[#allocation2] sm:$0xff] %v552
        %559 = vst [vmem:[#allocation2 + $0x8] sm:$0xff] %v553
        %560 = vst [vmem:[#allocation2 + $0x10] sm:$0xff] %v554
        %561 = vst [vmem:[#allocation2 + $0x18] sm:$0xff] %v555
        %562 = vst [vmem:[#allocation2 + $0x20] sm:$0xff] %v556
        %563 = vst [vmem:[#allocation2 + $0x28] sm:$0xff] %v557
        %p564 = scmp.eq.s32.totalorder %s33, 2
        // Predicated region
        $region65: #{tpu_custom_call.1} parent=39 // pred_check
          %p565 = pneg %p564
        $region66: #{tpu_custom_call.1} parent=39 // pred_check_branch
          %567 = sbr.rel (%p565) target = $region68
        $region67: #{tpu_custom_call.1} parent=39 // pred_region
          %v568 = vld [vmem:[#allocation2] sm:$0xff]
          %v569 = vld [vmem:[#allocation2 + $0x8] sm:$0xff]
          %v570 = vld [vmem:[#allocation2 + $0x10] sm:$0xff]
          %v571 = vld [vmem:[#allocation2 + $0x18] sm:$0xff]
          %v572 = vld [vmem:[#allocation2 + $0x20] sm:$0xff]
          %v573 = vld [vmem:[#allocation2 + $0x28] sm:$0xff]
          %v574 = vlaneseq
          %v575 = vshrl.u32 %v574, 7
          %v576 = vadd.s32 %v575, 8
          %v577 = vadd.s32 %v575, 16
          %v578 = vadd.s32 %v575, 24
          %v579 = vadd.s32 %v575, 32
          %v580 = vadd.s32 %v575, 40
          %v581 = vadd.s32 %v575, 48
          %v582 = vadd.s32 %v575, 56
          %v583 = vadd.s32 %v575, 64
          %v584 = vadd.s32 %v575, 72
          %v585 = vadd.s32 %v575, 80
          %v586 = vadd.s32 %v575, 88
          %v587 = vadd.s32 %v575, 96
          %v588 = vadd.s32 %v575, 104
          %v589 = vadd.s32 %v575, 112
          %v590 = vadd.s32 %v575, 120
          %v591 = vlaneseq
          %v592 = vand.u32 %v591, 127
          %vm593 = vcmp.eq.s32.totalorder %v575, %v592
          %vm594 = vcmp.eq.s32.totalorder %v576, %v592
          %vm595 = vcmp.eq.s32.totalorder %v577, %v592
          %vm596 = vcmp.eq.s32.totalorder %v578, %v592
          %vm597 = vcmp.eq.s32.totalorder %v579, %v592
          %vm598 = vcmp.eq.s32.totalorder %v580, %v592
          %vm599 = vcmp.eq.s32.totalorder %v581, %v592
          %vm600 = vcmp.eq.s32.totalorder %v582, %v592
          %vm601 = vcmp.eq.s32.totalorder %v583, %v592
          %vm602 = vcmp.eq.s32.totalorder %v584, %v592
          %vm603 = vcmp.eq.s32.totalorder %v585, %v592
          %vm604 = vcmp.eq.s32.totalorder %v586, %v592
          %vm605 = vcmp.eq.s32.totalorder %v587, %v592
          %vm606 = vcmp.eq.s32.totalorder %v588, %v592
          %vm607 = vcmp.eq.s32.totalorder %v589, %v592
          %vm608 = vcmp.eq.s32.totalorder %v590, %v592
          %vm609 = vcmp.lt.s32.totalorder %v592, 48
          %vm610 = vmand %vm593, %vm609
          %vm611 = vmand %vm594, %vm609
          %vm612 = vmand %vm595, %vm609
          %vm613 = vmand %vm596, %vm609
          %vm614 = vmand %vm597, %vm609
          %vm615 = vmand %vm598, %vm609
          %vm616 = vmand %vm599, %vm609
          %vm617 = vmand %vm600, %vm609
          %vm618 = vmand %vm601, %vm609
          %vm619 = vmand %vm602, %vm609
          %vm620 = vmand %vm603, %vm609
          %vm621 = vmand %vm604, %vm609
          %vm622 = vmand %vm605, %vm609
          %vm623 = vmand %vm606, %vm609
          %vm624 = vmand %vm607, %vm609
          %vm625 = vmand %vm608, %vm609
          %v626 = vsel %vm610, 1.0, 0.0
          %v627 = vsel %vm611, 1.0, 0.0
          %v628 = vsel %vm612, 1.0, 0.0
          %v629 = vsel %vm613, 1.0, 0.0
          %v630 = vsel %vm614, 1.0, 0.0
          %v631 = vsel %vm615, 1.0, 0.0
          %v632 = vsel %vm616, 1.0, 0.0
          %v633 = vsel %vm617, 1.0, 0.0
          %v634 = vsel %vm618, 1.0, 0.0
          %v635 = vsel %vm619, 1.0, 0.0
          %v636 = vsel %vm620, 1.0, 0.0
          %v637 = vsel %vm621, 1.0, 0.0
          %v638 = vsel %vm622, 1.0, 0.0
          %v639 = vsel %vm623, 1.0, 0.0
          %v640 = vsel %vm624, 1.0, 0.0
          %v641 = vsel %vm625, 1.0, 0.0
          %v642 = vadd.s32 %v592, 48
          %vm643 = vcmp.eq.s32.totalorder %v575, %v642
          %vm644 = vcmp.eq.s32.totalorder %v576, %v642
          %vm645 = vcmp.eq.s32.totalorder %v577, %v642
          %vm646 = vcmp.eq.s32.totalorder %v578, %v642
          %vm647 = vcmp.eq.s32.totalorder %v579, %v642
          %vm648 = vcmp.eq.s32.totalorder %v580, %v642
          %vm649 = vcmp.eq.s32.totalorder %v581, %v642
          %vm650 = vcmp.eq.s32.totalorder %v582, %v642
          %vm651 = vcmp.eq.s32.totalorder %v583, %v642
          %vm652 = vcmp.eq.s32.totalorder %v584, %v642
          %vm653 = vcmp.eq.s32.totalorder %v585, %v642
          %vm654 = vcmp.eq.s32.totalorder %v586, %v642
          %vm655 = vcmp.eq.s32.totalorder %v587, %v642
          %vm656 = vcmp.eq.s32.totalorder %v588, %v642
          %vm657 = vcmp.eq.s32.totalorder %v589, %v642
          %vm658 = vcmp.eq.s32.totalorder %v590, %v642
          %vm659 = vmand %vm643, %vm609
          %vm660 = vmand %vm644, %vm609
          %vm661 = vmand %vm645, %vm609
          %vm662 = vmand %vm646, %vm609
          %vm663 = vmand %vm647, %vm609
          %vm664 = vmand %vm648, %vm609
          %vm665 = vmand %vm649, %vm609
          %vm666 = vmand %vm650, %vm609
          %vm667 = vmand %vm651, %vm609
          %vm668 = vmand %vm652, %vm609
          %vm669 = vmand %vm653, %vm609
          %vm670 = vmand %vm654, %vm609
          %vm671 = vmand %vm655, %vm609
          %vm672 = vmand %vm656, %vm609
          %vm673 = vmand %vm657, %vm609
          %vm674 = vmand %vm658, %vm609
          %v675 = vsel %vm659, 1.0, 0.0
          %v676 = vsel %vm660, 1.0, 0.0
          %v677 = vsel %vm661, 1.0, 0.0
          %v678 = vsel %vm662, 1.0, 0.0
          %v679 = vsel %vm663, 1.0, 0.0
          %v680 = vsel %vm664, 1.0, 0.0
          %v681 = vsel %vm665, 1.0, 0.0
          %v682 = vsel %vm666, 1.0, 0.0
          %v683 = vsel %vm667, 1.0, 0.0
          %v684 = vsel %vm668, 1.0, 0.0
          %v685 = vsel %vm669, 1.0, 0.0
          %v686 = vsel %vm670, 1.0, 0.0
          %v687 = vsel %vm671, 1.0, 0.0
          %v688 = vsel %vm672, 1.0, 0.0
          %v689 = vsel %vm673, 1.0, 0.0
          %v690 = vsel %vm674, 1.0, 0.0
          %691 = vmatprep.subr.mxu0 0.0
          %692 = vmatpush1.msra.mxu0 %v626
          %693 = vmatprep.subr.mxu0 0.0
          %694 = vmatpush1.msra.mxu0 %v627
          %695 = vmatprep.subr.mxu0 0.0
          %696 = vmatpush1.msra.mxu0 %v628
          %697 = vmatprep.subr.mxu0 0.0
          %698 = vmatpush1.msra.mxu0 %v629
          %699 = vmatprep.subr.mxu0 0.0
          %700 = vmatpush1.msra.mxu0 %v630
          %701 = vmatprep.subr.mxu0 0.0
          %702 = vmatpush1.msra.mxu0 %v631
          %703 = vmatprep.subr.mxu0 0.0
          %704 = vmatpush1.msra.mxu0 %v632
          %705 = vmatprep.subr.mxu0 0.0
          %706 = vmatpush1.msra.mxu0 %v633
          %707 = vmatprep.subr.mxu0 0.0
          %708 = vmatpush1.msra.mxu0 %v634
          %709 = vmatprep.subr.mxu0 0.0
          %710 = vmatpush1.msra.mxu0 %v635
          %711 = vmatprep.subr.mxu0 0.0
          %712 = vmatpush1.msra.mxu0 %v636
          %713 = vmatprep.subr.mxu0 0.0
          %714 = vmatpush1.msra.mxu0 %v637
          %715 = vmatprep.subr.mxu0 0.0
          %716 = vmatpush1.msra.mxu0 %v638
          %717 = vmatprep.subr.mxu0 0.0
          %718 = vmatpush1.msra.mxu0 %v639
          %719 = vmatprep.subr.mxu0 0.0
          %720 = vmatpush1.msra.mxu0 %v640
          %721 = vmatprep.subr.mxu0 0.0
          %722 = vmatpush1.msra.mxu0 %v641
          %723 = vmatprep.subr.mxu0 0.0
          %724 = vmatpush1.msra.mxu0 0.0
          %725 = vmatprep.subr.mxu0 0.0
          %726 = vmatpush1.msra.mxu0 0.0
          %727 = vmatprep.subr.mxu0 0.0
          %728 = vmatpush1.msra.mxu0 0.0
          %729 = vmatprep.subr.mxu0 0.0
          %730 = vmatpush1.msra.mxu0 0.0
          %731 = vmatprep.subr.mxu0 0.0
          %732 = vmatpush1.msra.mxu0 0.0
          %733 = vmatprep.subr.mxu0 0.0
          %734 = vmatpush1.msra.mxu0 0.0
          %735 = vmatprep.subr.mxu0 0.0
          %736 = vmatpush1.msra.mxu0 0.0
          %737 = vmatprep.subr.mxu0 0.0
          %738 = vmatpush1.msra.mxu0 0.0
          %739 = vmatprep.subr.mxu0 0.0
          %740 = vmatpush1.msra.mxu0 0.0
          %741 = vmatprep.subr.mxu0 0.0
          %742 = vmatpush1.msra.mxu0 0.0
          %743 = vmatprep.subr.mxu0 0.0
          %744 = vmatpush1.msra.mxu0 0.0
          %745 = vmatprep.subr.mxu0 0.0
          %746 = vmatpush1.msra.mxu0 0.0
          %747 = vmatprep.subr.mxu0 0.0
          %748 = vmatpush1.msra.mxu0 0.0
          %749 = vmatprep.subr.mxu0 0.0
          %750 = vmatpush1.msra.mxu0 0.0
          %751 = vmatprep.subr.mxu0 0.0
          %752 = vmatpush1.msra.mxu0 0.0
          %753 = vmatprep.subr.mxu0 0.0
          %754 = vmatpush1.msra.mxu0 0.0
          %755 = vmatprep.mubr.f32.mxu0 0.0
          %756 = vmatmul.mubr.f32.gmra.mrb[0].mxu0 %v568
          %v757 = vpop.f32.mrb[0].mxu0
          %v758 = vadd.f32 0.0, %v757
          %v759 = vpop.f32.mrb[0].mxu0
          %760 = vmatprep.mubr.f32.mxu0 0.0
          %761 = vmatmul.mubr.f32.gmra.mrb[0].mxu0 %v569
          %v762 = vpop.f32.mrb[0].mxu0
          %v763 = vadd.f32 0.0, %v762
          %v764 = vpop.f32.mrb[0].mxu0
          %765 = vdwg.mxu0
          %766 = vmatprep.subr.mxu0 0.0
          %767 = vmatpush1.msra.mxu0 %v675
          %768 = vmatprep.subr.mxu0 0.0
          %769 = vmatpush1.msra.mxu0 %v676
          %770 = vmatprep.subr.mxu0 0.0
          %771 = vmatpush1.msra.mxu0 %v677
          %772 = vmatprep.subr.mxu0 0.0
          %773 = vmatpush1.msra.mxu0 %v678
          %774 = vmatprep.subr.mxu0 0.0
          %775 = vmatpush1.msra.mxu0 %v679
          %776 = vmatprep.subr.mxu0 0.0
          %777 = vmatpush1.msra.mxu0 %v680
          %778 = vmatprep.subr.mxu0 0.0
          %779 = vmatpush1.msra.mxu0 %v681
          %780 = vmatprep.subr.mxu0 0.0
          %781 = vmatpush1.msra.mxu0 %v682
          %782 = vmatprep.subr.mxu0 0.0
          %783 = vmatpush1.msra.mxu0 %v683
          %784 = vmatprep.subr.mxu0 0.0
          %785 = vmatpush1.msra.mxu0 %v684
          %786 = vmatprep.subr.mxu0 0.0
          %787 = vmatpush1.msra.mxu0 %v685
          %788 = vmatprep.subr.mxu0 0.0
          %789 = vmatpush1.msra.mxu0 %v686
          %790 = vmatprep.subr.mxu0 0.0
          %791 = vmatpush1.msra.mxu0 %v687
          %792 = vmatprep.subr.mxu0 0.0
          %793 = vmatpush1.msra.mxu0 %v688
          %794 = vmatprep.subr.mxu0 0.0
          %795 = vmatpush1.msra.mxu0 %v689
          %796 = vmatprep.subr.mxu0 0.0
          %797 = vmatpush1.msra.mxu0 %v690
          %798 = vmatprep.subr.mxu0 0.0
          %799 = vmatpush1.msra.mxu0 0.0
          %800 = vmatprep.subr.mxu0 0.0
          %801 = vmatpush1.msra.mxu0 0.0
          %802 = vmatprep.subr.mxu0 0.0
          %803 = vmatpush1.msra.mxu0 0.0
          %804 = vmatprep.subr.mxu0 0.0
          %805 = vmatpush1.msra.mxu0 0.0
          %806 = vmatprep.subr.mxu0 0.0
          %807 = vmatpush1.msra.mxu0 0.0
          %808 = vmatprep.subr.mxu0 0.0
          %809 = vmatpush1.msra.mxu0 0.0
          %810 = vmatprep.subr.mxu0 0.0
          %811 = vmatpush1.msra.mxu0 0.0
          %812 = vmatprep.subr.mxu0 0.0
          %813 = vmatpush1.msra.mxu0 0.0
          %814 = vmatprep.subr.mxu0 0.0
          %815 = vmatpush1.msra.mxu0 0.0
          %816 = vmatprep.subr.mxu0 0.0
          %817 = vmatpush1.msra.mxu0 0.0
          %818 = vmatprep.subr.mxu0 0.0
          %819 = vmatpush1.msra.mxu0 0.0
          %820 = vmatprep.subr.mxu0 0.0
          %821 = vmatpush1.msra.mxu0 0.0
          %822 = vmatprep.subr.mxu0 0.0
          %823 = vmatpush1.msra.mxu0 0.0
          %824 = vmatprep.subr.mxu0 0.0
          %825 = vmatpush1.msra.mxu0 0.0
          %826 = vmatprep.subr.mxu0 0.0
          %827 = vmatpush1.msra.mxu0 0.0
          %828 = vmatprep.subr.mxu0 0.0
          %829 = vmatpush1.msra.mxu0 0.0
          %830 = vmatprep.mubr.f32.mxu0 0.0
          %831 = vmatmul.mubr.f32.gmra.mrb[0].mxu0 %v570
          %v832 = vpop.f32.mrb[0].mxu0
          %v833 = vadd.f32 0.0, %v832
          %v834 = vpop.f32.mrb[0].mxu0
          %835 = vmatprep.mubr.f32.mxu0 0.0
          %836 = vmatmul.mubr.f32.gmra.mrb[0].mxu0 %v571
          %v837 = vpop.f32.mrb[0].mxu0
          %v838 = vadd.f32 0.0, %v837
          %v839 = vpop.f32.mrb[0].mxu0
          %840 = vmatprep.mubr.f32.mxu0 0.0
          %841 = vmatmul.mubr.f32.gmra.mrb[0].mxu0 %v572
          %v842 = vpop.f32.mrb[0].mxu0
          %v843 = vadd.f32 0.0, %v842
          %v844 = vpop.f32.mrb[0].mxu0
          %845 = vmatprep.mubr.f32.mxu0 0.0
          %846 = vmatmul.mubr.f32.gmra.mrb[0].mxu0 %v573
          %v847 = vpop.f32.mrb[0].mxu0
          %v848 = vadd.f32 0.0, %v847
          %v849 = vpop.f32.mrb[0].mxu0
          %850 = vdwg.mxu0
          %v851 = vld [vmem:[%s330] sm:$0xff]
          %v852 = vld [vmem:[%s330 + $0x8] sm:$0xff]
          %v853 = vld [vmem:[%s339] sm:$0xff]
          %v854 = vld [vmem:[%s339 + $0x8] sm:$0xff]
          %v855 = vld [vmem:[%s348] sm:$0xff]
          %v856 = vld [vmem:[%s348 + $0x8] sm:$0xff]
          %v857 = vmul.f32 %v758, %v833
          %v858 = vmul.f32 %v763, %v838
          %v859 = vadd.f32 %v851, %v857
          %v860 = vadd.f32 %v852, %v858
          %v861 = vsub.f32 %v859, %v853
          %v862 = vsub.f32 %v860, %v854
          %v863 = vmul.f32 %v758, %v843
          %v864 = vmul.f32 %v763, %v848
          %v865 = vadd.f32 %v851, %v863
          %v866 = vadd.f32 %v852, %v864
          %v867 = vsub.f32 %v865, %v855
          %v868 = vsub.f32 %v866, %v856
          %v869 = vmul.f32 %v861, %v861
          %v870 = vmul.f32 %v862, %v862
          %v871 = vmul.f32 %v867, %v867
          %v872 = vmul.f32 %v868, %v868
          %v873 = vadd.f32 %v869, 1.0
          %v874 = vadd.f32 %v870, 1.0
          %v875 = vsub.f32 %v873, %v871
          %v876 = vsub.f32 %v874, %v872
          %v877 = vmax.f32 %v875, 0.0
          %v878 = vmax.f32 %v876, 0.0
          %v879 = vsub.f32 %v851, %v758
          %v880 = vsub.f32 %v852, %v763
          %v881 = vsub.f32 %v853, %v833
          %v882 = vsub.f32 %v854, %v838
          %v883 = vmul.f32 %v869, 0.1
          %v884 = vmul.f32 %v870, 0.1
          %v885 = vadd.f32 %v877, %v883
          %v886 = vadd.f32 %v878, %v884
          %v887 = vmul.f32 %v879, %v879
          %v888 = vmul.f32 %v880, %v880
          %v889 = vmul.f32 %v881, %v881
          %v890 = vmul.f32 %v882, %v882
          %v891 = vadd.f32 %v887, %v889
          %v892 = vadd.f32 %v888, %v890
          %v893 = vmul.f32 %v891, 0.1
          %v894 = vmul.f32 %v892, 0.1
          %v895 = vadd.f32 %v885, %v893
          %v896 = vadd.f32 %v886, %v894
          %897 = vst [vmem:[%s412] sm:$0xff] %v895
          %898 = vst [vmem:[%s412 + $0x8] sm:$0xff] %v896
        $region68: #{tpu_custom_call.1} parent=39 // pred_fallthru
          _
        %s899 = sand.u32 %s180, 1
        %s900 = scalar_lea.sflag [#allocation5], %s899
        %s901 = sand.u32 %s180, 1
        %s902 = smul.addr %s901, 16
        %s903 = scalar_lea.vmem [#allocation12], %s902
        // Predicated region
        $region69: #{tpu_custom_call.1} parent=39 // pred_check
          %p904 = pneg %p190
        $region70: #{tpu_custom_call.1} parent=39 // pred_check_branch
          %906 = sbr.rel (%p904) target = $region72
        $region71: #{tpu_custom_call.1} parent=39 // pred_region
          %s907 = smul.u32 2, %s32
          %s909 = ssub.s32 256, 256
          %910 = vsyncadd %s900, %s909
          %s911 = smul.addr %s907, 128
          %s912 = scalar_lea.hbm %s5, %s911
          %s913 = sshll.u32 %s903, 4
          %s914 = int_to_ptr.vmem [resolvable:$true] %s913
          %919 = dma.vmem_to_hbm [thread:$0]  %s914, 256, %s912, %s900, 128, 128, 8
        $region72: #{tpu_custom_call.1} parent=39 // pred_fallthru
          _
      $region40: #{tpu_custom_call.1} parent=5 // pred_fallthru
        _
      %p920 = scmp.le.s32.totalorder 2, %s23
      // Predicated region
      $region73: #{tpu_custom_call.1} parent=5 // pred_check
        %p921 = pneg %p920
      $region74: #{tpu_custom_call.1} parent=5 // pred_check_branch
        %923 = sbr.rel (%p921) target = $region76
      $region75: #{tpu_custom_call.1} parent=5 // pred_region
        %s924 = ssub.s32 %s23, 2
        // Predicated region
        $region77: #{tpu_custom_call.1} parent=75 // pred_check
          %p925 = pneg %p196
        $region78: #{tpu_custom_call.1} parent=75 // pred_check_branch
          %927 = sbr.rel (%p925) target = $region80
        $region79: #{tpu_custom_call.1} parent=75 // pred_region
          %s928 = sand.u32 %s181, 1
          %s929 = scalar_lea.sflag [#allocation5], %s928
          %s930 = sand.u32 %s181, 1
          %s931 = smul.addr %s930, 16
          %s932 = scalar_lea.vmem [#allocation12], %s931
          %933 = dma.done %s929, 256
        $region80: #{tpu_custom_call.1} parent=75 // pred_fallthru
          _
      $region76: #{tpu_custom_call.1} parent=5 // pred_fallthru
        _
    $region6: #{tpu_custom_call.1} parent=1 // loop_footer
      %s27 = sadd.s32 1, %s23
    $region7: #{tpu_custom_call.1} parent=1 // loop_footer_branch
      %22 = sbr.rel target = $region3
    $region8: #{tpu_custom_call.1} parent=1 // loop_exit
      _
    %934 = vsyncpa [#allocation4], 1
    %s935 = scalar_lea.sflag [#allocation4], 1
    %936 = vsyncpa %s935, 1
    %937 = vsyncpa [#allocation7], 1
    %s938 = scalar_lea.sflag [#allocation7], 1
    %939 = vsyncpa %s938, 1
    %940 = vsyncpa [#allocation10], 1
    %s941 = scalar_lea.sflag [#allocation10], 1
    %942 = vsyncpa %s941, 1
    %943 = vsyncpa [#allocation5], 1
    %s944 = scalar_lea.sflag [#allocation5], 1
    %945 = vsyncpa %s944, 1

</llo_original>
